<compile_context>
chip_gen: v7x
topology: tpu7x:2x2x1
jax: 0.10.0
libtpu: 0.0.40
codegen_flags: <defaults>
</compile_context>

<pallas_src>
import math
from collections import Counter
from functools import partial

import numpy as np
import jax
import jax.numpy as jnp
from jax import lax
from jax.experimental import pallas as pl
from jax.experimental.pallas import tpu as pltpu


# ----------------------------------------------------------------------------
# Host-side BLEU (token-sequence n-gram matching; no Pallas hot path).
# TODO(synk): the reference's `BLEU` symbol is undefined upstream; we use a
# standard smoothed sentence-BLEU (4-gram, brevity penalty) on host.
# ----------------------------------------------------------------------------
def _ngram_counts(seq, n):
    return Counter(tuple(seq[i:i + n]) for i in range(len(seq) - n + 1))


def _sentence_bleu(refs, cnd, max_n=4):
    if len(cnd) == 0:
        return 0.0
    precisions = []
    for n in range(1, max_n + 1):
        cnd_counts = _ngram_counts(cnd, n)
        max_ref = Counter()
        for r in refs:
            for g, c in _ngram_counts(r, n).items():
                max_ref[g] = max(max_ref[g], c)
        clipped = sum(min(c, max_ref[g]) for g, c in cnd_counts.items())
        total = sum(cnd_counts.values())
        if total == 0:
            precisions.append(0.0)
            continue
        if n > 1:  # +1 smoothing for higher-order n-grams
            clipped += 1
            total += 1
        precisions.append(clipped / total)
    if min(precisions) <= 0.0:
        return 0.0
    log_p = sum(math.log(p) for p in precisions) / max_n
    ref_len = min((len(r) for r in refs), key=lambda rl: (abs(rl - len(cnd)), rl))
    bp = 1.0 if len(cnd) > ref_len else math.exp(1.0 - ref_len / max(len(cnd), 1))
    return bp * math.exp(log_p)


def get_bleu(out, dec_out):
    out = list(out)
    dec_out = list(dec_out)
    stop_token = 1
    cnd = out[:out.index(stop_token)] if stop_token in out else out
    ref = [dec_out[:dec_out.index(stop_token)]] if stop_token in dec_out else [dec_out]
    return _sentence_bleu(ref, cnd)


# ----------------------------------------------------------------------------
# Pallas kernel: per-sentence masked row reductions (factored form).
# ----------------------------------------------------------------------------
def _loss_kernel(pb_ref, pred_ref, g1_ref, len_ref, out_ref):
    pb = pb_ref[...].astype(jnp.float32)     # (TB, S); accepts bf16 input, f32 accumulation
    pred = pred_ref[...]                     # (TB, S) native int dtype (no unpack/astype)
    g1 = g1_ref[...]                         # (TB, S)
    lens = len_ref[...]                      # (TB, 1) int32; -1 on ragged/pad rows

    TB, S = pb.shape
    col = lax.broadcasted_iota(jnp.int32, (TB, S), 1)

    in_len = col < lens                      # wgt1 (== wgt2) mask
    in_len3 = in_len | (col == lens)         # col < min(len+1, S)   (col < S always holds)
    mism = in_len & (col >= 1) & (pred != g1)  # hamming mismatches, kept as bool

    neg_pb = -pb
    rowsum12 = jnp.sum(jnp.where(in_len, neg_pb, 0.0), axis=1, keepdims=True)   # (TB, 1)
    rowsum3 = jnp.sum(jnp.where(in_len3, neg_pb, 0.0), axis=1, keepdims=True)   # (TB, 1)
    r1 = jnp.sum(mism, axis=1, keepdims=True).astype(jnp.float32)               # (TB, 1)

    # Merge the three statistics into a single (TB, 3) store: one writeback DMA per grid
    # step instead of three.  Built with lane-broadcast + select only (no relayout ops).
    lane = lax.broadcasted_iota(jnp.int32, (TB, 3), 1)
    out_ref[...] = jnp.where(lane == 0, rowsum12,
                             jnp.where(lane == 1, rowsum3, r1))


# ----------------------------------------------------------------------------
# Tiling plan + jitted device entry points
# ----------------------------------------------------------------------------
def _cdiv(a, b):
    return -(-a // b)


def _round_up(a, m):
    return _cdiv(a, m) * m


_VMEM_TILE_BUDGET = 16 * 1024 * 1024   # target double-buffered bytes per grid step


def _plan_batch_tiles(B, S, in_itemsizes):
    """Pick (rows_per_tile, num_tiles) from a VMEM byte budget."""
    s_pad = _round_up(max(S, 1), 128)                            # VMEM lane padding
    # x2 pipeline buffers; + (tb,1) lens tile and (tb,3) out tile, each padded to 128 lanes.
    per_row = 2 * (sum(in_itemsizes) * s_pad + 2 * 128 * 4)
    rows_cap = max(8, (_VMEM_TILE_BUDGET // per_row) // 8 * 8)
    num_tiles = max(1, _cdiv(B, rows_cap))
    if B >= 16:
        num_tiles = max(num_tiles, 2)   # v7x: let ("parallel",) shard across both TensorCores
    tb = _round_up(_cdiv(B, num_tiles), 8)
    return tb, num_tiles


@jax.jit
def _rowstats(pb, pred, g1, lens):
    """pb (B,S), pred/g1 (B,S) int, lens (B,) -> stats (B,3) f32 = [rowsum12, rowsum3, r1]."""
    B, S = pb.shape
    tb, num_tiles = _plan_batch_tiles(
        B, S, (pb.dtype.itemsize, pred.dtype.itemsize, g1.dtype.itemsize))
    b_pad = tb * num_tiles

    lens2d = lens.reshape(-1).astype(jnp.int32)[:, None]         # (B, 1)
    if b_pad != B:
        # Pad ONLY the tiny lens column (-1 => all masks empty on the ragged rows).  The big
        # (B,S) streams are NOT padded: OOB rows of the last tile read garbage, but their
        # masks are empty and their output rows fall outside (B,3) so the writes are dropped.
        lens2d = jnp.pad(lens2d, ((0, b_pad - B), (0, 0)), constant_values=-1)

    row_spec = lambda: pl.BlockSpec((tb, S), lambda i: (i, 0))
    stats = pl.pallas_call(
        _loss_kernel,
        grid=(num_tiles,),
        in_specs=[row_spec(), row_spec(), row_spec(),
                  pl.BlockSpec((tb, 1), lambda i: (i, 0))],
        out_specs=pl.BlockSpec((tb, 3), lambda i: (i, 0)),
        out_shape=jax.ShapeDtypeStruct((B, 3), jnp.float32),
        compiler_params=pltpu.CompilerParams(
            dimension_semantics=("parallel",),     # batch tiles -> both TCs on v7x
            vmem_limit_bytes=32 * 1024 * 1024,     # explicit for v5e's 16 MiB scoped default
        ),
    )(pb, pred, g1, lens2d)
    return stats


@partial(jax.jit, static_argnames=("seq_len",))
def _epilogue(stats, lens, rewards3, *, seq_len):
    """Tiny fused O(B) epilogue: dot with rewards, counts from lens, guarded divisions."""
    lens = lens.reshape(-1).astype(jnp.int32)
    rewards3 = rewards3.astype(jnp.float32)
    rowsum12, rowsum3, r1 = stats[:, 0], stats[:, 1], stats[:, 2]

    cnt12 = jnp.sum(jnp.clip(lens, 0, seq_len)).astype(jnp.float32)
    cnt3 = jnp.sum(jnp.clip(lens + 1, 0, seq_len)).astype(jnp.float32)
    num1 = jnp.sum(rowsum12 * r1)
    num3 = jnp.sum(rowsum3 * rewards3)
    ls1 = jnp.where(cnt12 > 0, num1 / cnt12, jnp.float32(0.0))
    ls3 = jnp.where(cnt3 > 0, num3 / cnt3, jnp.float32(0.0))
    rewards_ave1 = jnp.mean(r1)
    rewards_ave3 = jnp.mean(rewards3)
    loss = ls3
    return loss, ls1, ls3, rewards_ave1, rewards_ave3


# ----------------------------------------------------------------------------
# Wrapper mirroring LossBiafRL1.forward
# ----------------------------------------------------------------------------
def loss_biaf_rl1_forward(sel, pb, predicted_out, golden_out, mask_id, stc_length_out,
                          sudo_golden_out, sudo_golden_out_1, ori_words, ori_words_length,
                          vocab_size=None):
    # TODO(synk): write_text / np.loadtxt('temp.txt') file I/O is omitted (the loaded
    # `meaning_preservation` is immediately overwritten by bleus_w * 100 in the reference,
    # so it is dead code).
    # NOTE: the sudo_golden_out_1 / ls2 / r2 path is dropped entirely: ls2 never reaches the
    # module's return value, and skipping it removes one full (B,S) HBM stream.
    pb_j = jnp.asarray(pb)                    # f32 (or bf16 if the producer supplies it)
    pred_j = jnp.asarray(predicted_out)       # native int dtype -- no wrapper-side cast pass
    g1_j = jnp.asarray(sudo_golden_out)
    lens_j = jnp.asarray(stc_length_out)
    B, S = int(pb_j.shape[0]), int(pb_j.shape[1])

    # Dispatch the jitted Pallas kernel first (async) so it overlaps the host BLEU loop.
    stats = _rowstats(pb_j, pred_j, g1_j, lens_j)

    # Host BLEU: candidate = ori_words[i], reference = sel[i] (as in the reference code).
    sel_np = np.asarray(sel)
    ori_np = np.asarray(ori_words)
    bleus_w = np.asarray([get_bleu(ori_np[i], sel_np[i]) for i in range(B)], dtype=np.float32)
    rewards3 = jnp.asarray(bleus_w * 100.0)

    return _epilogue(stats, lens_j, rewards3, seq_len=S)


# ----------------------------------------------------------------------------
# Pure-numpy reference for validation
# ----------------------------------------------------------------------------
def _ref_forward(pb, pred, g1, lens, rew3):
    B, S = pb.shape
    col = np.arange(S)[None, :]
    rmask = (col >= 1) & (col < lens[:, None])
    r1 = ((pred != g1) & rmask).sum(axis=1).astype(np.float64)
    wgt12 = (col < lens[:, None]).astype(np.float64)
    ls1 = (-pb * r1[:, None] * wgt12).sum() / wgt12.sum()
    wgt3 = (col < np.minimum(lens[:, None] + 1, S)).astype(np.float64)
    ls3 = (-pb * rew3[:, None] * wgt3).sum() / wgt3.sum()
    return ls3, ls1, ls3, r1.mean(), rew3.mean()


if __name__ == "__main__":
    key = jax.random.PRNGKey(0)
    B, S, V = 8, 16, 50

    ks = jax.random.split(key, 8)
    sel = jax.random.randint(ks[0], (B, S), 2, V, dtype=jnp.int32)
    pb = -jax.random.uniform(ks[1], (B, S), dtype=jnp.float32)          # log-prob-like (negative)
    predicted_out = jax.random.randint(ks[2], (B, S), 2, V, dtype=jnp.int32)
    golden_out = jax.random.randint(ks[3], (B, S), 2, V, dtype=jnp.int32)
    mask_id = jnp.ones((B, S), dtype=jnp.int32)
    stc_length_out = jax.random.randint(ks[4], (B,), 3, S + 1, dtype=jnp.int32)
    sudo_golden_out = jax.random.randint(ks[5], (B, S), 2, V, dtype=jnp.int32)
    sudo_golden_out_1 = jax.random.randint(ks[6], (B, S), 2, V, dtype=jnp.int32)
    ori_words = jax.random.randint(ks[7], (B, S), 2, V, dtype=jnp.int32)
    ori_words_length = jnp.full((B,), S, dtype=jnp.int32)

    outs = loss_biaf_rl1_forward(sel, pb, predicted_out, golden_out, mask_id,
                                 stc_length_out, sudo_golden_out, sudo_golden_out_1,
                                 ori_words, ori_words_length, vocab_size=V)
    outs = jax.block_until_ready(outs)
    loss, ls1, ls3, ave1, ave3 = [float(x) for x in outs]

    # validate against numpy reference
    sel_np = np.asarray(sel)
    ori_np = np.asarray(ori_words)
    bleus_w = np.asarray([get_bleu(ori_np[i], sel_np[i]) for i in range(B)], dtype=np.float64)
    ref = _ref_forward(np.asarray(pb, dtype=np.float64), np.asarray(predicted_out),
                       np.asarray(sudo_golden_out), np.asarray(stc_length_out),
                       bleus_w * 100.0)
    got = (loss, ls1, ls3, ave1, ave3)
    np.testing.assert_allclose(got, ref, rtol=1e-5, atol=1e-5)

    print("KERNEL_OK")
</pallas_src>

<mosaic_0001>
module attributes {stable_mosaic.version = 11 : i64} {
  func.func @_loss_kernel(%arg0: i32, %arg1: memref<8x16xf32, #tpu.memory_space<vmem>>, %arg2: memref<8x16xi32, #tpu.memory_space<vmem>>, %arg3: memref<8x16xi32, #tpu.memory_space<vmem>>, %arg4: memref<8x1xi32, #tpu.memory_space<vmem>>, %arg5: memref<8x3xf32, #tpu.memory_space<vmem>>) attributes {dimension_semantics = [#tpu.dimension_semantics<parallel>], iteration_bounds = array<i64: 1>, scalar_prefetch = 0 : i64, scratch_operands = 0 : i64, tpu.core_type = #tpu.core_type<tc>, window_params = [{transform_indices = @transform_0, window_bounds = array<i64: 8, 16>}, {transform_indices = @transform_1, window_bounds = array<i64: 8, 16>}, {transform_indices = @transform_2, window_bounds = array<i64: 8, 16>}, {transform_indices = @transform_3, window_bounds = array<i64: 8, 1>}, {transform_indices = @transform_4, window_bounds = array<i64: 8, 3>}]} {
    %c0 = arith.constant 0 : index
    %c0_0 = arith.constant 0 : index
    %0 = vector.load %arg1[%c0, %c0_0] : memref<8x16xf32, #tpu.memory_space<vmem>>, vector<8x16xf32>
    %c0_1 = arith.constant 0 : index
    %c0_2 = arith.constant 0 : index
    %1 = vector.load %arg2[%c0_1, %c0_2] : memref<8x16xi32, #tpu.memory_space<vmem>>, vector<8x16xi32>
    %c0_3 = arith.constant 0 : index
    %c0_4 = arith.constant 0 : index
    %2 = vector.load %arg3[%c0_3, %c0_4] : memref<8x16xi32, #tpu.memory_space<vmem>>, vector<8x16xi32>
    %c0_5 = arith.constant 0 : index
    %c0_6 = arith.constant 0 : index
    %3 = vector.load %arg4[%c0_5, %c0_6] : memref<8x1xi32, #tpu.memory_space<vmem>>, vector<8x1xi32>
    %4 = tpu.iota {dimensions = array<i32: 1>} : vector<8x16xi32>
    %5 = vector.broadcast %3 : vector<8x1xi32> to vector<8x16xi32>
    %6 = arith.cmpi slt, %4, %5 : vector<8x16xi32>
    %7 = vector.broadcast %3 : vector<8x1xi32> to vector<8x16xi32>
    %8 = arith.cmpi eq, %4, %7 : vector<8x16xi32>
    %9 = arith.ori %6, %8 : vector<8x16xi1>
    %c1_i32 = arith.constant 1 : i32
    %10 = vector.broadcast %c1_i32 : i32 to vector<8x16xi32>
    %11 = arith.cmpi sge, %4, %10 : vector<8x16xi32>
    %12 = arith.andi %6, %11 : vector<8x16xi1>
    %13 = arith.cmpi ne, %1, %2 : vector<8x16xi32>
    %14 = arith.andi %12, %13 : vector<8x16xi1>
    %cst = arith.constant 0.000000e+00 : f32
    %15 = vector.broadcast %cst : f32 to vector<8x16xf32>
    %16 = arith.subf %15, %0 : vector<8x16xf32>
    %cst_7 = arith.constant 0.000000e+00 : f32
    %17 = vector.broadcast %cst_7 : f32 to vector<8x16xf32>
    %18 = arith.select %6, %16, %17 : vector<8x16xi1>, vector<8x16xf32>
    %cst_8 = arith.constant dense<0.000000e+00> : vector<8xf32>
    %19 = vector.multi_reduction <add>, %18, %cst_8 [1] : vector<8x16xf32> to vector<8xf32>
    %20 = vector.shape_cast %19 : vector<8xf32> to vector<8x1xf32>
    %cst_9 = arith.constant 0.000000e+00 : f32
    %21 = vector.broadcast %cst_9 : f32 to vector<8x16xf32>
    %22 = arith.select %9, %16, %21 : vector<8x16xi1>, vector<8x16xf32>
    %cst_10 = arith.constant dense<0.000000e+00> : vector<8xf32>
    %23 = vector.multi_reduction <add>, %22, %cst_10 [1] : vector<8x16xf32> to vector<8xf32>
    %24 = vector.shape_cast %23 : vector<8xf32> to vector<8x1xf32>
    %25 = arith.extui %14 : vector<8x16xi1> to vector<8x16xi32>
    %cst_11 = arith.constant dense<0> : vector<8xi32>
    %26 = vector.multi_reduction <add>, %25, %cst_11 [1] : vector<8x16xi32> to vector<8xi32>
    %27 = vector.shape_cast %26 : vector<8xi32> to vector<8x1xi32>
    %28 = arith.sitofp %27 : vector<8x1xi32> to vector<8x1xf32>
    %29 = tpu.iota {dimensions = array<i32: 1>} : vector<8x3xi32>
    %c0_i32 = arith.constant 0 : i32
    %30 = vector.broadcast %c0_i32 : i32 to vector<8x3xi32>
    %31 = arith.cmpi eq, %29, %30 : vector<8x3xi32>
    %c1_i32_12 = arith.constant 1 : i32
    %32 = vector.broadcast %c1_i32_12 : i32 to vector<8x3xi32>
    %33 = arith.cmpi eq, %29, %32 : vector<8x3xi32>
    %34 = vector.shape_cast %24 : vector<8x1xf32> to vector<8x1xf32>
    %35 = vector.broadcast %34 : vector<8x1xf32> to vector<8x3xf32>
    %36 = vector.shape_cast %28 : vector<8x1xf32> to vector<8x1xf32>
    %37 = vector.broadcast %36 : vector<8x1xf32> to vector<8x3xf32>
    %38 = arith.select %33, %35, %37 : vector<8x3xi1>, vector<8x3xf32>
    %39 = vector.shape_cast %20 : vector<8x1xf32> to vector<8x1xf32>
    %40 = vector.broadcast %39 : vector<8x1xf32> to vector<8x3xf32>
    %41 = arith.select %31, %40, %38 : vector<8x3xi1>, vector<8x3xf32>
    %c0_13 = arith.constant 0 : index
    %c0_14 = arith.constant 0 : index
    %42 = vector.load %arg5[%c0_13, %c0_14] : memref<8x3xf32, #tpu.memory_space<vmem>>, vector<8x3xf32>
    tpu.vector_store %arg5[%c0_13, %c0_14], %41 {strides = array<i32>} : memref<8x3xf32, #tpu.memory_space<vmem>>, vector<8x3xf32>,
    return
  }
  func.func @transform_0(%arg0: i32) -> (i32, i32) {
    %c0_i32 = arith.constant 0 : i32
    %c0_i32_0 = arith.constant 0 : i32
    return %arg0, %c0_i32 : i32, i32
  }
  func.func @transform_1(%arg0: i32) -> (i32, i32) {
    %c0_i32 = arith.constant 0 : i32
    %c0_i32_0 = arith.constant 0 : i32
    return %arg0, %c0_i32 : i32, i32
  }
  func.func @transform_2(%arg0: i32) -> (i32, i32) {
    %c0_i32 = arith.constant 0 : i32
    %c0_i32_0 = arith.constant 0 : i32
    return %arg0, %c0_i32 : i32, i32
  }
  func.func @transform_3(%arg0: i32) -> (i32, i32) {
    %c0_i32 = arith.constant 0 : i32
    %c0_i32_0 = arith.constant 0 : i32
    return %arg0, %c0_i32 : i32, i32
  }
  func.func @transform_4(%arg0: i32) -> (i32, i32) {
    %c0_i32 = arith.constant 0 : i32
    %c0_i32_0 = arith.constant 0 : i32
    return %arg0, %c0_i32 : i32, i32
  }
}

</mosaic_0001>

<llo_original>
// kernel: _rowstats.1
$region0: #{_rowstats.1}
  #allocation0 [shape = 'u32[]', space=smem, size = 0x4, offset = 0x4, fixed_abs, tag = 'smem constant byte address 0x4 - core index']
  #allocation1 [shape = 'u32[144,128]{1,0:T(1,128)}', space=vmem, size = 0x12000, scoped, tag = 'internal scratch']
  %s0 = inlined_call_operand.vmem [shape: f32[8,16], index: 0, kind: input, shape index: {}]
  %s1 = inlined_call_operand.vmem [shape: s32[8,16], index: 1, kind: input, shape index: {}]
  %s2 = inlined_call_operand.hbm [shape: s32[8,16], index: 2, kind: input, shape index: {}]
  %s3 = inlined_call_operand.vmem [shape: s32[8,1], index: 3, kind: input, shape index: {}]
  %s4 = inlined_call_operand.vmem [shape: f32[8,3], index: 4, kind: output, shape index: {}]
  %s5 = sld [smem:[#allocation0]]
  $region30: #{_rowstats.1} parent=0
    _
  %s7 = ssub.s32 1, %s5
  %s8 = scalar_select 0, %s7, %s5
  $region1: #{_rowstats.1} parent=0
    #allocation2 [shape = 'u8[4096]{0}', space=vmem, size = 0x1000, scoped, tag = 'input window, operand 2, single buffered']
    #allocation3 [shape = 's32[1]{0}', space=sflag, size = 0x4, scoped, tag = 'scoped memory for _rowstats.1']
    %9 = vsyncpa [#allocation3], 0
    // Predicated region
    $region2: #{_rowstats.1} parent=1 // pred_check
      _
    $region3: #{_rowstats.1} parent=1 // pred_check_branch
      %11 = sbr.rel (0) target = $region5
    $region4: #{_rowstats.1} parent=1 // pred_region
      _
    $region5: #{_rowstats.1} parent=1 // pred_fallthru
      _
    // Predicated region
    $region6: #{_rowstats.1} parent=1 // pred_check
      _
    $region7: #{_rowstats.1} parent=1 // pred_check_branch
      %13 = sbr.rel (0) target = $region9
    $region8: #{_rowstats.1} parent=1 // pred_region
      _
    $region9: #{_rowstats.1} parent=1 // pred_fallthru
      _
    // Predicated region
    $region10: #{_rowstats.1} parent=1 // pred_check
      _
    $region11: #{_rowstats.1} parent=1 // pred_check_branch
      %15 = sbr.rel (0) target = $region13
    $region12: #{_rowstats.1} parent=1 // pred_region
      %s17 = ssub.s32 128, 128
      %18 = vsyncadd [#allocation3], %s17
      %s20 = sshll.u32 [#allocation2], 4
      %s21 = int_to_ptr.vmem [resolvable:$true] %s20
      %23 = dma.hbm_to_vmem [thread:$0]  %s2, 128, %s21, [#allocation3]
    $region13: #{_rowstats.1} parent=1 // pred_fallthru
      _
    // Predicated region
    $region14: #{_rowstats.1} parent=1 // pred_check
      _
    $region15: #{_rowstats.1} parent=1 // pred_check_branch
      %25 = sbr.rel (0) target = $region17
    $region16: #{_rowstats.1} parent=1 // pred_region
      _
    $region17: #{_rowstats.1} parent=1 // pred_fallthru
      _
    // Predicated region
    $region18: #{_rowstats.1} parent=1 // pred_check
      _
    $region19: #{_rowstats.1} parent=1 // pred_check_branch
      %27 = sbr.rel (0) target = $region21
    $region20: #{_rowstats.1} parent=1 // pred_region
      %28 = dma.done [#allocation3], 128
    $region21: #{_rowstats.1} parent=1 // pred_fallthru
      _
    %v29 = vld [vmem:[%s0] sm:$0xff]
    %v30 = vld [vmem:[%s1] sm:$0xff]
    %v31 = vld [vmem:[#allocation2] sm:$0xff]
    %v32 = vld [vmem:[%s3] sm:$0xff]
    %v33 = vlaneseq
    %v34 = vand.u32 %v33, 127
    %35 = vset.pattern.permute.xlu0 0
    %36 = vperm.xlu0 %35, %v32
    %v37 = vpop.permute.xlu0 %36
    %vm38 = vcmp.lt.s32.totalorder %v34, %v37
    %vm39 = vcmp.eq.s32.totalorder %v34, %v37
    %vm40 = vmor %vm38, %vm39
    %vm41 = vcmp.ge.s32.totalorder %v34, 1
    %vm42 = vmand %vm38, %vm41
    %vm43 = vcmp.ne.s32.totalorder %v30, %v31
    %vm44 = vmand %vm42, %vm43
    %v45 = vsub.f32 0.0, %v29
    %v46 = vsel %vm38, %v45, 0.0
    %vm47 = vcmask 130048
    %v48 = vsel %vm47, %v46, 0.0
    %49 = vadd.xlane.f32.xlu0 %v48
    %v50 = vpop.xlane.xlu0 %49
    %v51 = vsel %vm40, %v45, 0.0
    %v52 = vsel %vm47, %v51, 0.0
    %53 = vadd.xlane.f32.xlu0 %v52
    %v54 = vpop.xlane.xlu0 %53
    %v55 = vsel %vm44, 1, 0
    %v56 = vsel %vm47, %v55, 0
    %v57 = vand.u32 %v56, 65535
    %v58 = vshrl.u32 %v56, 16
    %v59 = vcvt.s32.f32 %v57
    %v60 = vcvt.s32.f32 %v58
    %61 = vadd.xlane.f32.xlu0 %v59
    %v62 = vpop.xlane.xlu0 %61
    %63 = vadd.xlane.f32.xlu0 %v60
    %v64 = vpop.xlane.xlu0 %63
    %v65 = vcvt.f32.s32 %v62
    %v66 = vcvt.f32.s32 %v64
    %v67 = vshll.u32 %v66, 16
    %v68 = vadd.s32 %v67, %v65
    %v69 = vcvt.s32.f32 %v68
    %vm70 = vcmp.eq.s32.totalorder %v34, 0
    %vm71 = vcmp.eq.s32.totalorder %v34, 1
    %v72 = vsel %vm71, %v54, %v69
    %v73 = vsel %vm70, %v50, %v72
    %vm74 = vcmask 23552
    %75 = vst.msk [vmem:[%s4] sm:$0xff] %vm74, %v73
    // Predicated region
    $region22: #{_rowstats.1} parent=1 // pred_check
      _
    $region23: #{_rowstats.1} parent=1 // pred_check_branch
      %77 = sbr.rel (0) target = $region25
    $region24: #{_rowstats.1} parent=1 // pred_region
      _
    $region25: #{_rowstats.1} parent=1 // pred_fallthru
      _
    // Predicated region
    $region26: #{_rowstats.1} parent=1 // pred_check
      _
    $region27: #{_rowstats.1} parent=1 // pred_check_branch
      %79 = sbr.rel (0) target = $region29
    $region28: #{_rowstats.1} parent=1 // pred_region
      _
    $region29: #{_rowstats.1} parent=1 // pred_fallthru
      _
    %80 = vsyncpa [#allocation3], 1

</llo_original>
